<compile_context>
chip_gen: v5e
topology: v5e:2x2
jax: 0.10.0
libtpu: 0.0.40
codegen_flags: <defaults>
</compile_context>

<pallas_src>
import jax
import jax.numpy as jnp
from jax.experimental import pallas as pl
from jax.experimental.pallas import tpu as pltpu


def _cls_left_kernel(xlr_ref, dem_ref, wb_ref, o_ref):
    """y = [xL|xR] @ W_lr + dem @ W_dem + b, with W_lr/W_dem/b packed in wb_ref.

    xlr_ref: (B, dLR)      merged left+right features
    dem_ref: (B, dD)       demographic features
    wb_ref:  (dLR+dD+1, C) rows [0:dLR) = W_lr, [dLR:dLR+dD) = W_dem, last row = bias
    o_ref:   (B, C)
    """
    B, dLR = xlr_ref.shape
    dD = dem_ref.shape[1]
    F = dLR + dD

    # Bias folded in: accumulator starts from the bias row, broadcast over batch.
    acc = jnp.broadcast_to(wb_ref[F:F + 1, :], o_ref.shape).astype(jnp.float32)

    # Single MXU pass: (B, 128) @ (128, C), f32 accumulation.
    acc = acc + jnp.dot(
        xlr_ref[...], wb_ref[:dLR, :], preferred_element_type=jnp.float32
    )

    # Demographic term (K = dD = 6) on the VPU: unrolled broadcast-MACs,
    # (B,1) * (1,C) -> (B,C).  Avoids a second, nearly empty systolic pass.
    for k in range(dD):
        acc = acc + (
            dem_ref[:, k:k + 1].astype(jnp.float32)
            * wb_ref[dLR + k:dLR + k + 1, :].astype(jnp.float32)
        )

    o_ref[...] = acc.astype(o_ref.dtype)


def classification_for_left_path(xL, xR, demographic, W, b):
    """Pallas implementation of: cat([xL, xR, demographic], dim=1) -> Linear(x).

    W is the Linear weight transposed to (F, C); b is (C,).
    """
    B, dL = xL.shape
    Br, dR = xR.shape
    Bd, dD = demographic.shape
    F, C = W.shape
    assert Br == B and Bd == B, "torch.cat(dim=1) requires equal batch dims"
    assert F == dL + dR + dD

    # --- one-time parameter / constant-input packing (glue) -----------------
    # xR (and demographic) are module constants in the original nn.Module, so
    # in a real deployment this concat is init-time work, not per-call work.
    x_lr = jnp.concatenate([xL, xR], axis=1)                 # (B, dL+dR) = one MXU K-tile
    wb = jnp.concatenate([W, b.reshape(1, C)], axis=0)       # (F+1, C): weight rows + bias row

    vmem = lambda: pl.BlockSpec(memory_space=pltpu.MemorySpace.VMEM)

    out = pl.pallas_call(
        _cls_left_kernel,
        out_shape=jax.ShapeDtypeStruct((B, C), xL.dtype),
        in_specs=[vmem(), vmem(), vmem()],
        out_specs=vmem(),
    )(x_lr, demographic, wb)
    return out


if __name__ == "__main__":
    key = jax.random.PRNGKey(0)
    kxl, kxr, kdem, kw, kb = jax.random.split(key, 5)

    # demographic was `unsqueeze(dim=0)`-ed in the reference script -> batch 1,
    # and torch.cat(dim=1) forces xL / xR to share that batch dim.
    B = 1
    dL, dR, dD = 64, 64, 6       # left features, right features, demographic features
    C = 3                        # number of classes
    F = dL + dR + dD

    xL = jax.random.normal(kxl, (B, dL), jnp.float32)
    xR = jax.random.normal(kxr, (B, dR), jnp.float32)
    demographic = jax.random.normal(kdem, (B, dD), jnp.float32)

    # classification_layer ~ nn.Linear(F, C): torch weight (C, F), bias (C,)
    W_torch = jax.random.normal(kw, (C, F), jnp.float32) * 0.1
    bias = jax.random.normal(kb, (C,), jnp.float32) * 0.1
    W = W_torch.T                # (F, C) layout used by the kernel

    y = classification_for_left_path(xL, xR, demographic, W, bias)
    y = jax.block_until_ready(y)

    # Pure-JAX reference: exact torch semantics (cat along dim=1, then Linear).
    x_cat = jnp.concatenate([xL, xR, demographic], axis=1)
    y_ref = x_cat @ W + bias
    assert y.shape == (B, C)
    assert jnp.allclose(y, y_ref, atol=1e-5, rtol=1e-5), "mismatch vs reference"

    print("KERNEL_OK")
</pallas_src>

<mosaic_0001>
module attributes {stable_mosaic.version = 11 : i64} {
  func.func @_cls_left_kernel(%arg0: memref<1x128xf32, #tpu.memory_space<vmem>>, %arg1: memref<1x6xf32, #tpu.memory_space<vmem>>, %arg2: memref<135x3xf32, #tpu.memory_space<vmem>>, %arg3: memref<1x3xf32, #tpu.memory_space<vmem>>) attributes {dimension_semantics = [], scalar_prefetch = 0 : i64, scratch_operands = 0 : i64, tpu.core_type = #tpu.core_type<tc>} {
    %c134 = arith.constant 134 : index
    %c0 = arith.constant 0 : index
    %0 = vector.load %arg2[%c134, %c0] : memref<135x3xf32, #tpu.memory_space<vmem>>, vector<1x3xf32>
    %c0_0 = arith.constant 0 : index
    %c0_1 = arith.constant 0 : index
    %1 = vector.load %arg0[%c0_0, %c0_1] : memref<1x128xf32, #tpu.memory_space<vmem>>, vector<1x128xf32>
    %c0_2 = arith.constant 0 : index
    %c0_3 = arith.constant 0 : index
    %2 = vector.load %arg2[%c0_2, %c0_3] : memref<135x3xf32, #tpu.memory_space<vmem>>, vector<128x3xf32>
    %cst = arith.constant dense<0.000000e+00> : vector<1x3xf32>
    %3 = tpu.matmul %1, %2, %cst {dimension_numbers = #tpu.dot_dimension_numbers<[1], [0], [0], [1], [0, 0, 1, 1], [], []>} : vector<1x128xf32>, vector<128x3xf32>, vector<1x3xf32> -> vector<1x3xf32>
    %4 = arith.addf %0, %3 : vector<1x3xf32>
    %c0_4 = arith.constant 0 : index
    %c0_5 = arith.constant 0 : index
    %5 = vector.load %arg1[%c0_4, %c0_5] : memref<1x6xf32, #tpu.memory_space<vmem>>, vector<1x1xf32>
    %c128 = arith.constant 128 : index
    %c0_6 = arith.constant 0 : index
    %6 = vector.load %arg2[%c128, %c0_6] : memref<135x3xf32, #tpu.memory_space<vmem>>, vector<1x3xf32>
    %7 = vector.broadcast %5 : vector<1x1xf32> to vector<1x3xf32>
    %8 = arith.mulf %7, %6 : vector<1x3xf32>
    %9 = arith.addf %4, %8 : vector<1x3xf32>
    %c0_7 = arith.constant 0 : index
    %c1 = arith.constant 1 : index
    %10 = vector.load %arg1[%c0_7, %c1] : memref<1x6xf32, #tpu.memory_space<vmem>>, vector<1x1xf32>
    %c129 = arith.constant 129 : index
    %c0_8 = arith.constant 0 : index
    %11 = vector.load %arg2[%c129, %c0_8] : memref<135x3xf32, #tpu.memory_space<vmem>>, vector<1x3xf32>
    %12 = vector.broadcast %10 : vector<1x1xf32> to vector<1x3xf32>
    %13 = arith.mulf %12, %11 : vector<1x3xf32>
    %14 = arith.addf %9, %13 : vector<1x3xf32>
    %c0_9 = arith.constant 0 : index
    %c2 = arith.constant 2 : index
    %15 = vector.load %arg1[%c0_9, %c2] : memref<1x6xf32, #tpu.memory_space<vmem>>, vector<1x1xf32>
    %c130 = arith.constant 130 : index
    %c0_10 = arith.constant 0 : index
    %16 = vector.load %arg2[%c130, %c0_10] : memref<135x3xf32, #tpu.memory_space<vmem>>, vector<1x3xf32>
    %17 = vector.broadcast %15 : vector<1x1xf32> to vector<1x3xf32>
    %18 = arith.mulf %17, %16 : vector<1x3xf32>
    %19 = arith.addf %14, %18 : vector<1x3xf32>
    %c0_11 = arith.constant 0 : index
    %c3 = arith.constant 3 : index
    %20 = vector.load %arg1[%c0_11, %c3] : memref<1x6xf32, #tpu.memory_space<vmem>>, vector<1x1xf32>
    %c131 = arith.constant 131 : index
    %c0_12 = arith.constant 0 : index
    %21 = vector.load %arg2[%c131, %c0_12] : memref<135x3xf32, #tpu.memory_space<vmem>>, vector<1x3xf32>
    %22 = vector.broadcast %20 : vector<1x1xf32> to vector<1x3xf32>
    %23 = arith.mulf %22, %21 : vector<1x3xf32>
    %24 = arith.addf %19, %23 : vector<1x3xf32>
    %c0_13 = arith.constant 0 : index
    %c4 = arith.constant 4 : index
    %25 = vector.load %arg1[%c0_13, %c4] : memref<1x6xf32, #tpu.memory_space<vmem>>, vector<1x1xf32>
    %c132 = arith.constant 132 : index
    %c0_14 = arith.constant 0 : index
    %26 = vector.load %arg2[%c132, %c0_14] : memref<135x3xf32, #tpu.memory_space<vmem>>, vector<1x3xf32>
    %27 = vector.broadcast %25 : vector<1x1xf32> to vector<1x3xf32>
    %28 = arith.mulf %27, %26 : vector<1x3xf32>
    %29 = arith.addf %24, %28 : vector<1x3xf32>
    %c0_15 = arith.constant 0 : index
    %c5 = arith.constant 5 : index
    %30 = vector.load %arg1[%c0_15, %c5] : memref<1x6xf32, #tpu.memory_space<vmem>>, vector<1x1xf32>
    %c133 = arith.constant 133 : index
    %c0_16 = arith.constant 0 : index
    %31 = vector.load %arg2[%c133, %c0_16] : memref<135x3xf32, #tpu.memory_space<vmem>>, vector<1x3xf32>
    %32 = vector.broadcast %30 : vector<1x1xf32> to vector<1x3xf32>
    %33 = arith.mulf %32, %31 : vector<1x3xf32>
    %34 = arith.addf %29, %33 : vector<1x3xf32>
    %c0_17 = arith.constant 0 : index
    %c0_18 = arith.constant 0 : index
    %35 = vector.load %arg3[%c0_17, %c0_18] : memref<1x3xf32, #tpu.memory_space<vmem>>, vector<1x3xf32>
    tpu.vector_store %arg3[%c0_17, %c0_18], %34 {strides = array<i32>} : memref<1x3xf32, #tpu.memory_space<vmem>>, vector<1x3xf32>,
    return
  }
}

</mosaic_0001>

<llo_original>
// kernel: tpu_custom_call.1
$region0: #{tpu_custom_call.1}
  #allocation0 [shape = 'u32[]', space=smem, size = 0x4, offset = 0x4, fixed_abs, tag = 'smem constant byte address 0x4 - core index']
  #allocation1 [shape = 'u32[72,128]{1,0:T(1,128)}', space=vmem, size = 0x9000, scoped, tag = 'internal scratch']
  %s0 = inlined_call_operand.vmem [shape: f32[1,128], index: 0, kind: input, shape index: {}]
  %s1 = inlined_call_operand.vmem [shape: f32[1,6], index: 1, kind: input, shape index: {}]
  %s2 = inlined_call_operand.vmem [shape: f32[135,3], index: 2, kind: input, shape index: {}]
  %s3 = inlined_call_operand.hbm [shape: f32[1,3], index: 3, kind: output, shape index: {}]
  %s4 = sld [smem:[#allocation0]]
  $region22: #{tpu_custom_call.1} parent=0
    _
  %s6 = ssub.s32 1, %s4
  %s7 = scalar_select 0, %s6, %s4
  $region1: #{tpu_custom_call.1} parent=0
    #allocation2 [shape = 'u8[512]{0}', space=vmem, size = 0x400, scoped, tag = 'output window, operand 0, single buffered']
    #allocation3 [shape = 's32[1]{0}', space=sflag, size = 0x4, scoped, tag = 'scoped memory for tpu_custom_call.1']
    %8 = vsyncpa [#allocation3], 0
    // Predicated region
    $region2: #{tpu_custom_call.1} parent=1 // pred_check
      _
    $region3: #{tpu_custom_call.1} parent=1 // pred_check_branch
      %10 = sbr.rel (0) target = $region5
    $region4: #{tpu_custom_call.1} parent=1 // pred_region
      _
    $region5: #{tpu_custom_call.1} parent=1 // pred_fallthru
      _
    // Predicated region
    $region6: #{tpu_custom_call.1} parent=1 // pred_check
      _
    $region7: #{tpu_custom_call.1} parent=1 // pred_check_branch
      %12 = sbr.rel (0) target = $region9
    $region8: #{tpu_custom_call.1} parent=1 // pred_region
      _
    $region9: #{tpu_custom_call.1} parent=1 // pred_fallthru
      _
    // Predicated region
    $region10: #{tpu_custom_call.1} parent=1 // pred_check
      _
    $region11: #{tpu_custom_call.1} parent=1 // pred_check_branch
      %14 = sbr.rel (0) target = $region13
    $region12: #{tpu_custom_call.1} parent=1 // pred_region
      _
    $region13: #{tpu_custom_call.1} parent=1 // pred_fallthru
      _
    %v15 = vld [vmem:[%s2 + $0x86] sm:$0x1]
    %v16 = vld [vmem:[%s0] sm:$0x1]
    %v17 = vld [vmem:[%s2] sm:$0xff]
    %v18 = vld [vmem:[%s2 + $0x8] sm:$0xff]
    %v19 = vld [vmem:[%s2 + $0x10] sm:$0xff]
    %v20 = vld [vmem:[%s2 + $0x18] sm:$0xff]
    %v21 = vld [vmem:[%s2 + $0x20] sm:$0xff]
    %v22 = vld [vmem:[%s2 + $0x28] sm:$0xff]
    %v23 = vld [vmem:[%s2 + $0x30] sm:$0xff]
    %v24 = vld [vmem:[%s2 + $0x38] sm:$0xff]
    %v25 = vld [vmem:[%s2 + $0x40] sm:$0xff]
    %v26 = vld [vmem:[%s2 + $0x48] sm:$0xff]
    %v27 = vld [vmem:[%s2 + $0x50] sm:$0xff]
    %v28 = vld [vmem:[%s2 + $0x58] sm:$0xff]
    %v29 = vld [vmem:[%s2 + $0x60] sm:$0xff]
    %v30 = vld [vmem:[%s2 + $0x68] sm:$0xff]
    %v31 = vld [vmem:[%s2 + $0x70] sm:$0xff]
    %v32 = vld [vmem:[%s2 + $0x78] sm:$0xff]
    %33 = vmatpush.msra.mxu0 %v32
    %34 = vmatpush.msra.mxu0 %v31
    %35 = vmatpush.msra.mxu0 %v30
    %36 = vmatpush.msra.mxu0 %v29
    %37 = vmatpush.msra.mxu0 %v28
    %38 = vmatpush.msra.mxu0 %v27
    %39 = vmatpush.msra.mxu0 %v26
    %40 = vmatpush.msra.mxu0 %v25
    %41 = vmatpush.msra.mxu0 %v24
    %42 = vmatpush.msra.mxu0 %v23
    %43 = vmatpush.msra.mxu0 %v22
    %44 = vmatpush.msra.mxu0 %v21
    %45 = vmatpush.msra.mxu0 %v20
    %46 = vmatpush.msra.mxu0 %v19
    %47 = vmatpush.msra.mxu0 %v18
    %48 = vmatpush.msra.mxu0 %v17
    %49 = vmatmul.f32.gmra.mxu0 %v16
    %v50 = vpop.f32.mrf.mxu0
    %v51 = vadd.f32 0.0, %v50
    %52 = vdwg.mxu0
    %v53 = vadd.f32 %v15, %v51
    %v54 = vld [vmem:[%s1] sm:$0x1]
    %v55 = vld [vmem:[%s2 + $0x80] sm:$0x1]
    %57 = vset.pattern.permute.xlu0 0
    %58 = vperm.xlu0 %57, %v54
    %v59 = vpop.permute.xlu0 %58
    %v61 = vperm.slane %v59, 0
    %v62 = vmul.f32 %v61, %v55
    %v63 = vadd.f32 %v53, %v62
    %v64 = vld [vmem:[%s2 + $0x81] sm:$0x1]
    %65 = vset.pattern.permute.xlu0 1
    %66 = vperm.xlu0 %65, %v54
    %v67 = vpop.permute.xlu0 %66
    %v69 = vperm.slane %v67, 0
    %v70 = vmul.f32 %v69, %v64
    %v71 = vadd.f32 %v63, %v70
    %v72 = vld [vmem:[%s2 + $0x82] sm:$0x1]
    %73 = vset.pattern.permute.xlu0 2
    %74 = vperm.xlu0 %73, %v54
    %v75 = vpop.permute.xlu0 %74
    %v77 = vperm.slane %v75, 0
    %v78 = vmul.f32 %v77, %v72
    %v79 = vadd.f32 %v71, %v78
    %v80 = vld [vmem:[%s2 + $0x83] sm:$0x1]
    %81 = vset.pattern.permute.xlu0 3
    %82 = vperm.xlu0 %81, %v54
    %v83 = vpop.permute.xlu0 %82
    %v85 = vperm.slane %v83, 0
    %v86 = vmul.f32 %v85, %v80
    %v87 = vadd.f32 %v79, %v86
    %v88 = vld [vmem:[%s2 + $0x84] sm:$0x1]
    %89 = vset.pattern.permute.xlu0 4
    %90 = vperm.xlu0 %89, %v54
    %v91 = vpop.permute.xlu0 %90
    %v93 = vperm.slane %v91, 0
    %v94 = vmul.f32 %v93, %v88
    %v95 = vadd.f32 %v87, %v94
    %v96 = vld [vmem:[%s2 + $0x85] sm:$0x1]
    %97 = vset.pattern.permute.xlu0 5
    %98 = vperm.xlu0 %97, %v54
    %v99 = vpop.permute.xlu0 %98
    %v101 = vperm.slane %v99, 0
    %v102 = vmul.f32 %v101, %v96
    %v103 = vadd.f32 %v95, %v102
    %vm104 = vcmask 16384
    %105 = vst.msk [vmem:[#allocation2] sm:$0x1] %vm104, %v103
    // Predicated region
    $region14: #{tpu_custom_call.1} parent=1 // pred_check
      _
    $region15: #{tpu_custom_call.1} parent=1 // pred_check_branch
      %107 = sbr.rel (0) target = $region17
    $region16: #{tpu_custom_call.1} parent=1 // pred_region
      %109 = vsyncadd [#allocation3], 0
      %s111 = sshll.u32 [#allocation2], 4
      %s112 = int_to_ptr.vmem [resolvable:$true] %s111
      %s113 = sshll.u32 %s3, 4
      %s114 = int_to_ptr.hbm [resolvable:$true] %s113
      %116 = dma.vmem_to_hbm [thread:$0]  %s112, 16, %s114, [#allocation3]
    $region17: #{tpu_custom_call.1} parent=1 // pred_fallthru
      _
    // Predicated region
    $region18: #{tpu_custom_call.1} parent=1 // pred_check
      _
    $region19: #{tpu_custom_call.1} parent=1 // pred_check_branch
      %118 = sbr.rel (0) target = $region21
    $region20: #{tpu_custom_call.1} parent=1 // pred_region
      %120 = dma.done [#allocation3], 16
    $region21: #{tpu_custom_call.1} parent=1 // pred_fallthru
      _
    %121 = vsyncpa [#allocation3], 1

</llo_original>
